<compile_context>
chip_gen: v6e
topology: v6e:2x2x1
jax: 0.10.0
libtpu: 0.0.40
codegen_flags: <defaults>
</compile_context>

<pallas_src>
import functools

import jax
import jax.numpy as jnp
from jax.experimental import pallas as pl
from jax.experimental.pallas import tpu as pltpu


def up_conv_kernel(x_ref, w_ref, mask_ref, scale_ref, shift_ref, o_ref, *, W):
    """One (batch, row-block) grid step.

    x_ref:     (1, 1, Cin_p, L)      bf16  slab: RB+2 zero-padded rows,
                                           flattened, +1 zero element each end
    w_ref:     (3, 4*Cout, 3*Cin_p)  bf16  upsample-folded weights, grouped by
                                           tap row offset a
    mask_ref:  (2, RB*W)             bf16  [0]: q != 0,  [1]: q != W-1
    scale_ref: (4*Cout, 1)           f32   folded BN scale (phase x channel)
    shift_ref: (4*Cout, 1)           f32   folded conv-bias + BN shift
    o_ref:     (1, 4*Cout, RB*W)     bf16  conv+BN+ReLU, phase-major rows
    """
    rbw = o_ref.shape[2]

    x = x_ref[0, 0]                       # (Cin_p, L) bf16
    masks = mask_ref[...]                 # (2, RB*W)  bf16
    m_left = masks[0:1, :]                # valid where q != 0     (b == 0 tap)
    m_right = masks[1:2, :]               # valid where q != W-1   (b == 2 tap)

    acc = None
    for a in range(3):                    # tap row offset dh = a - 1
        taps = []
        for b in range(3):                # tap col offset dw = b - 1
            # Output flat index g reads slab element g + a*W + b (see host slab
            # construction): a static lane-offset slice, no 9x copy of x.
            t = x[:, a * W + b: a * W + b + rbw]            # (Cin_p, RB*W)
            if b == 0:
                t = t * m_left
            elif b == 2:
                t = t * m_right
            taps.append(t)
        xk = jnp.concatenate(taps, axis=0)                  # (3*Cin_p, RB*W)
        part = jnp.dot(w_ref[a], xk, preferred_element_type=jnp.float32)
        acc = part if acc is None else acc + part           # (4*Cout, RB*W) f32

    # Folded conv-bias + BatchNorm (inference) + ReLU, in f32; store bf16.
    y = acc * scale_ref[...] + shift_ref[...]
    o_ref[0] = jnp.maximum(y, 0.0).astype(o_ref.dtype)


def _fold_upsample_into_weights(w):
    """(Cout, Cin, 3, 3) conv weights -> (3, 4*Cout, 3*Cin) phase weights.

    Output index [a, phase*Cout + cout, b*Cin + cin]; phase = 2*pi + pj is the
    output row/col parity and tap (a, b) reads original pixel (p+a-1, q+b-1).
    A 3x3 conv on the 2x-nearest-upsampled image reduces, per phase, to sums of
    the original 3x3 taps placed on a <=2x2 neighborhood of the original image.
    """
    Cout, Cin = w.shape[0], w.shape[1]
    wb = jnp.zeros((4, Cout, 3, 3, Cin), jnp.float32)
    for pi in range(2):
        for pj in range(2):
            ph = 2 * pi + pj
            for dh in range(3):
                for dw in range(3):
                    a = (pi + dh - 1) // 2 + 1
                    b = (pj + dw - 1) // 2 + 1
                    wb = wb.at[ph, :, a, b, :].add(w[:, :, dh, dw])
    # (ph, co, a, b, ci) -> (a, ph*Cout + co, b*Cin + ci)
    return jnp.transpose(wb, (2, 0, 1, 3, 4)).reshape(3, 4 * Cout, 3 * Cin)


def _choose_rows_per_block(H, W, target_lanes=2048):
    """Smallest row block whose lane count is a multiple of 128 and >= target."""
    for rb in range(1, H + 1):
        if (H % rb == 0 and (rb * W) % 128 == 0
                and rb * W >= min(target_lanes, H * W)):
            return rb
    return H  # whole image; block == full dim is always a legal BlockSpec


def up_conv_forward(x_nchw, params, rows_per_block=None):
    """x_nchw: (N, Cin, H, W) f32.  Returns (N, Cout, 2H, 2W) f32 (NCHW)."""
    w = params["conv_w"]          # (Cout, Cin, 3, 3)  PyTorch layout
    bias = params["conv_b"]       # (Cout,)
    gamma, beta = params["bn_gamma"], params["bn_beta"]
    rmean, rvar = params["bn_mean"], params["bn_var"]
    eps = 1e-5

    N, Cin, H, W = x_nchw.shape
    Cout = w.shape[0]
    HW = H * W

    # ---- host-side prep (cheap relative to the conv) -----------------------
    # Pad Cin to a multiple of 16 (bf16 sublane packing) so the per-row-group
    # tap concat and MXU K staging stay relayout-free.  Zero channels are inert.
    cin_p = -(-Cin // 16) * 16
    if cin_p != Cin:
        x_nchw = jnp.pad(x_nchw, ((0, 0), (0, cin_p - Cin), (0, 0), (0, 0)))
        w = jnp.pad(w, ((0, 0), (0, cin_p - Cin), (0, 0), (0, 0)))

    # Row-block tiling with 1-row halo; RB*W is the lane-dense output tile.
    if (rows_per_block is not None and H % rows_per_block == 0
            and (rows_per_block == H or (rows_per_block * W) % 128 == 0)):
        rb = rows_per_block
    else:
        rb = _choose_rows_per_block(H, W)
    nblk = H // rb
    rbw = rb * W
    slab_len = (rb + 2) * W + 2     # RB rows + halo rows + 1 zero elem each end

    # Upsample folded into the conv weights; bf16 for MXU rate / HBM bandwidth.
    w_g = _fold_upsample_into_weights(w).astype(jnp.bfloat16)   # (3,4Cout,3Cin_p)

    # Conv bias + BN (inference) folded into a per-channel affine, per phase.
    bn_scale = gamma / jnp.sqrt(rvar + eps)                     # (Cout,)
    shift = (bias - rmean) * bn_scale + beta                    # (Cout,)
    scale4 = jnp.tile(bn_scale, 4).reshape(4 * Cout, 1).astype(jnp.float32)
    shift4 = jnp.tile(shift, 4).reshape(4 * Cout, 1).astype(jnp.float32)

    # Column-edge validity masks for the +/-1 column taps (pattern repeats
    # every W, so one (2, RB*W) array serves every row block / batch element).
    q = jnp.arange(rbw, dtype=jnp.int32) % W
    colmask = jnp.stack([(q != 0), (q != W - 1)]).astype(jnp.bfloat16)

    # Input slabs: zero-pad rows (conv padding + halo), window RB+2 rows per
    # block, flatten, then add one zero element at each end so every tap is a
    # static, in-range lane-offset slice inside the kernel.
    xb = x_nchw.astype(jnp.bfloat16)
    xp = jnp.pad(xb, ((0, 0), (0, 0), (1, 1), (0, 0)))          # (N,Cin_p,H+2,W)
    slabs = jnp.stack(
        [xp[:, :, r * rb: r * rb + rb + 2, :] for r in range(nblk)], axis=1)
    slabs = slabs.reshape(N, nblk, cin_p, (rb + 2) * W)
    slabs = jnp.pad(slabs, ((0, 0), (0, 0), (0, 0), (1, 1)))    # (N,nblk,Cin_p,L)

    # ---- pallas_call --------------------------------------------------------
    flops = 2 * (4 * Cout) * (9 * cin_p) * HW * N
    bytes_accessed = int(slabs.size * 2 + w_g.size * 2 + colmask.size * 2
                         + scale4.size * 4 + shift4.size * 4
                         + N * 4 * Cout * HW * 2)
    step_bytes = (cin_p * slab_len * 2 + w_g.size * 2 + colmask.size * 2
                  + scale4.size * 4 + shift4.size * 4 + 4 * Cout * rbw * 2)
    vmem_limit = int(min(max(6 * step_bytes, 8 << 20), 64 << 20))

    kernel = functools.partial(up_conv_kernel, W=W)
    out = pl.pallas_call(
        kernel,
        out_shape=jax.ShapeDtypeStruct((N, 4 * Cout, HW), jnp.bfloat16),
        grid_spec=pltpu.PrefetchScalarGridSpec(
            num_scalar_prefetch=0,
            grid=(N, nblk),
            in_specs=[
                pl.BlockSpec((1, 1, cin_p, slab_len), lambda n, r: (n, r, 0, 0)),
                pl.BlockSpec((3, 4 * Cout, 3 * cin_p), lambda n, r: (0, 0, 0)),
                pl.BlockSpec((2, rbw), lambda n, r: (0, 0)),
                pl.BlockSpec((4 * Cout, 1), lambda n, r: (0, 0)),
                pl.BlockSpec((4 * Cout, 1), lambda n, r: (0, 0)),
            ],
            out_specs=pl.BlockSpec((1, 4 * Cout, rbw), lambda n, r: (n, 0, r)),
        ),
        compiler_params=pltpu.CompilerParams(
            dimension_semantics=("parallel", "parallel"),
            vmem_limit_bytes=vmem_limit),
        cost_estimate=pl.CostEstimate(
            flops=flops, transcendentals=0, bytes_accessed=bytes_accessed),
    )(slabs, w_g, colmask, scale4, shift4)

    # De-interleave the 4 phases back into NCHW.  Done in bf16 (half the bytes
    # of the previous f32 transpose); the final cast restores the module's f32.
    y = out.reshape(N, 2, 2, Cout, H, W)
    y = jnp.transpose(y, (0, 3, 4, 1, 5, 2))                    # (N,Cout,H,2,W,2)
    return y.reshape(N, Cout, 2 * H, 2 * W).astype(jnp.float32)


def reference_forward(x_nchw, params):
    """Pure-JAX f32 reference (lax conv) for correctness checking."""
    w = params["conv_w"]
    b = params["conv_b"]
    eps = 1e-5
    x = jnp.repeat(jnp.repeat(x_nchw, 2, axis=2), 2, axis=3)    # nearest 2x (NCHW)
    y = jax.lax.conv_general_dilated(
        x, w, window_strides=(1, 1), padding=((1, 1), (1, 1)),
        dimension_numbers=("NCHW", "OIHW", "NCHW"))
    y = y + b.reshape(1, -1, 1, 1)
    scale = params["bn_gamma"] / jnp.sqrt(params["bn_var"] + eps)
    y = (y - params["bn_mean"].reshape(1, -1, 1, 1)) * scale.reshape(1, -1, 1, 1)
    y = y + params["bn_beta"].reshape(1, -1, 1, 1)
    return jnp.maximum(y, 0.0)


def init_params(key, ch_in, ch_out):
    k1, k2, k3, k4, k5, k6 = jax.random.split(key, 6)
    fan_in = ch_in * 3 * 3
    bound = 1.0 / (fan_in ** 0.5)
    return {
        "conv_w": jax.random.uniform(k1, (ch_out, ch_in, 3, 3),
                                     jnp.float32, -bound, bound),
        "conv_b": jax.random.uniform(k2, (ch_out,), jnp.float32, -bound, bound),
        "bn_gamma": 1.0 + 0.1 * jax.random.normal(k3, (ch_out,), jnp.float32),
        "bn_beta": 0.1 * jax.random.normal(k4, (ch_out,), jnp.float32),
        "bn_mean": 0.1 * jax.random.normal(k5, (ch_out,), jnp.float32),
        "bn_var": jnp.abs(1.0 + 0.1 * jax.random.normal(k6, (ch_out,),
                                                        jnp.float32)),
    }


if __name__ == "__main__":
    key = jax.random.PRNGKey(0)
    kx, kp = jax.random.split(key)

    N, Cin, H, W = 2, 4, 16, 16
    Cout = 8

    x = jax.random.normal(kx, (N, Cin, H, W), jnp.float32)
    params = init_params(kp, Cin, Cout)

    # rows_per_block=8 -> 2 row blocks of 128 lanes each: exercises the tiled
    # path (grid=(N, 2)) at demo size.
    fwd = jax.jit(functools.partial(up_conv_forward, rows_per_block=8))
    out = jax.block_until_ready(fwd(x, params))

    ref = jax.block_until_ready(reference_forward(x, params))
    assert out.shape == (N, Cout, 2 * H, 2 * W), out.shape
    # bf16 inputs/weights/output with f32 accumulation -> small numerical
    # deviation from the pure-f32 reference; indexing/folding bugs would be O(1).
    max_err = float(jnp.max(jnp.abs(out - ref)))
    assert jnp.allclose(out, ref, atol=5e-2, rtol=5e-2), max_err

    print("KERNEL_OK")
</pallas_src>

<mosaic_0001>
module attributes {stable_mosaic.version = 11 : i64} {
  func.func @up_conv_kernel(%arg0: i32, %arg1: i32, %arg2: memref<1x1x16x162xbf16, #tpu.memory_space<vmem>>, %arg3: memref<3x32x48xbf16, #tpu.memory_space<vmem>>, %arg4: memref<2x128xbf16, #tpu.memory_space<vmem>>, %arg5: memref<32x1xf32, #tpu.memory_space<vmem>>, %arg6: memref<32x1xf32, #tpu.memory_space<vmem>>, %arg7: memref<1x32x128xbf16, #tpu.memory_space<vmem>>) attributes {dimension_semantics = [#tpu.dimension_semantics<parallel>, #tpu.dimension_semantics<parallel>], iteration_bounds = array<i64: 2, 2>, scalar_prefetch = 0 : i64, scratch_operands = 0 : i64, tpu.core_type = #tpu.core_type<tc>, window_params = [{transform_indices = @transform_0, window_bounds = array<i64: 1, 1, 16, 162>}, {pipeline_mode = #tpu.pipeline_mode<synchronous>, transform_indices = @transform_1, window_bounds = array<i64: 3, 32, 48>}, {pipeline_mode = #tpu.pipeline_mode<synchronous>, transform_indices = @transform_2, window_bounds = array<i64: 2, 128>}, {pipeline_mode = #tpu.pipeline_mode<synchronous>, transform_indices = @transform_3, window_bounds = array<i64: 32, 1>}, {pipeline_mode = #tpu.pipeline_mode<synchronous>, transform_indices = @transform_4, window_bounds = array<i64: 32, 1>}, {transform_indices = @transform_5, window_bounds = array<i64: 1, 32, 128>}]} {
    %c0 = arith.constant 0 : index
    %c0_0 = arith.constant 0 : index
    %c0_1 = arith.constant 0 : index
    %c0_2 = arith.constant 0 : index
    %0 = vector.load %arg2[%c0, %c0_0, %c0_1, %c0_2] : memref<1x1x16x162xbf16, #tpu.memory_space<vmem>>, vector<1x1x16x162xbf16>
    %1 = vector.shape_cast %0 : vector<1x1x16x162xbf16> to vector<16x162xbf16>
    %c0_3 = arith.constant 0 : index
    %c0_4 = arith.constant 0 : index
    %2 = vector.load %arg4[%c0_3, %c0_4] : memref<2x128xbf16, #tpu.memory_space<vmem>>, vector<2x128xbf16>
    %3 = vector.extract_strided_slice %2 {offsets = [0, 0], sizes = [1, 128], strides = [1, 1]} : vector<2x128xbf16> to vector<1x128xbf16>
    %4 = vector.extract_strided_slice %2 {offsets = [1, 0], sizes = [1, 128], strides = [1, 1]} : vector<2x128xbf16> to vector<1x128xbf16>
    %5 = vector.extract_strided_slice %1 {offsets = [0, 0], sizes = [16, 128], strides = [1, 1]} : vector<16x162xbf16> to vector<16x128xbf16>
    %6 = vector.broadcast %3 : vector<1x128xbf16> to vector<16x128xbf16>
    %7 = arith.mulf %5, %6 : vector<16x128xbf16>
    %8 = vector.extract_strided_slice %1 {offsets = [0, 1], sizes = [16, 128], strides = [1, 1]} : vector<16x162xbf16> to vector<16x128xbf16>
    %9 = vector.extract_strided_slice %1 {offsets = [0, 2], sizes = [16, 128], strides = [1, 1]} : vector<16x162xbf16> to vector<16x128xbf16>
    %10 = vector.broadcast %4 : vector<1x128xbf16> to vector<16x128xbf16>
    %11 = arith.mulf %9, %10 : vector<16x128xbf16>
    %12 = tpu.concatenate %7, %8, %11 in 0 : vector<16x128xbf16>, vector<16x128xbf16>, vector<16x128xbf16> -> vector<48x128xbf16>
    %c0_5 = arith.constant 0 : index
    %c0_6 = arith.constant 0 : index
    %c0_7 = arith.constant 0 : index
    %13 = vector.load %arg3[%c0_5, %c0_6, %c0_7] : memref<3x32x48xbf16, #tpu.memory_space<vmem>>, vector<1x32x48xbf16>
    %14 = vector.shape_cast %13 : vector<1x32x48xbf16> to vector<32x48xbf16>
    %cst = arith.constant dense<0.000000e+00> : vector<32x128xf32>
    %15 = tpu.matmul %14, %12, %cst {dimension_numbers = #tpu.dot_dimension_numbers<[1], [0], [0], [1], [0, 0, 1, 1], [], []>} : vector<32x48xbf16>, vector<48x128xbf16>, vector<32x128xf32> -> vector<32x128xf32>
    %16 = vector.extract_strided_slice %1 {offsets = [0, 16], sizes = [16, 128], strides = [1, 1]} : vector<16x162xbf16> to vector<16x128xbf16>
    %17 = vector.broadcast %3 : vector<1x128xbf16> to vector<16x128xbf16>
    %18 = arith.mulf %16, %17 : vector<16x128xbf16>
    %19 = vector.extract_strided_slice %1 {offsets = [0, 17], sizes = [16, 128], strides = [1, 1]} : vector<16x162xbf16> to vector<16x128xbf16>
    %20 = vector.extract_strided_slice %1 {offsets = [0, 18], sizes = [16, 128], strides = [1, 1]} : vector<16x162xbf16> to vector<16x128xbf16>
    %21 = vector.broadcast %4 : vector<1x128xbf16> to vector<16x128xbf16>
    %22 = arith.mulf %20, %21 : vector<16x128xbf16>
    %23 = tpu.concatenate %18, %19, %22 in 0 : vector<16x128xbf16>, vector<16x128xbf16>, vector<16x128xbf16> -> vector<48x128xbf16>
    %c1 = arith.constant 1 : index
    %c0_8 = arith.constant 0 : index
    %c0_9 = arith.constant 0 : index
    %24 = vector.load %arg3[%c1, %c0_8, %c0_9] : memref<3x32x48xbf16, #tpu.memory_space<vmem>>, vector<1x32x48xbf16>
    %25 = vector.shape_cast %24 : vector<1x32x48xbf16> to vector<32x48xbf16>
    %cst_10 = arith.constant dense<0.000000e+00> : vector<32x128xf32>
    %26 = tpu.matmul %25, %23, %cst_10 {dimension_numbers = #tpu.dot_dimension_numbers<[1], [0], [0], [1], [0, 0, 1, 1], [], []>} : vector<32x48xbf16>, vector<48x128xbf16>, vector<32x128xf32> -> vector<32x128xf32>
    %27 = arith.addf %15, %26 : vector<32x128xf32>
    %28 = vector.extract_strided_slice %1 {offsets = [0, 32], sizes = [16, 128], strides = [1, 1]} : vector<16x162xbf16> to vector<16x128xbf16>
    %29 = vector.broadcast %3 : vector<1x128xbf16> to vector<16x128xbf16>
    %30 = arith.mulf %28, %29 : vector<16x128xbf16>
    %31 = vector.extract_strided_slice %1 {offsets = [0, 33], sizes = [16, 128], strides = [1, 1]} : vector<16x162xbf16> to vector<16x128xbf16>
    %32 = vector.extract_strided_slice %1 {offsets = [0, 34], sizes = [16, 128], strides = [1, 1]} : vector<16x162xbf16> to vector<16x128xbf16>
    %33 = vector.broadcast %4 : vector<1x128xbf16> to vector<16x128xbf16>
    %34 = arith.mulf %32, %33 : vector<16x128xbf16>
    %35 = tpu.concatenate %30, %31, %34 in 0 : vector<16x128xbf16>, vector<16x128xbf16>, vector<16x128xbf16> -> vector<48x128xbf16>
    %c2 = arith.constant 2 : index
    %c0_11 = arith.constant 0 : index
    %c0_12 = arith.constant 0 : index
    %36 = vector.load %arg3[%c2, %c0_11, %c0_12] : memref<3x32x48xbf16, #tpu.memory_space<vmem>>, vector<1x32x48xbf16>
    %37 = vector.shape_cast %36 : vector<1x32x48xbf16> to vector<32x48xbf16>
    %cst_13 = arith.constant dense<0.000000e+00> : vector<32x128xf32>
    %38 = tpu.matmul %37, %35, %cst_13 {dimension_numbers = #tpu.dot_dimension_numbers<[1], [0], [0], [1], [0, 0, 1, 1], [], []>} : vector<32x48xbf16>, vector<48x128xbf16>, vector<32x128xf32> -> vector<32x128xf32>
    %39 = arith.addf %27, %38 : vector<32x128xf32>
    %c0_14 = arith.constant 0 : index
    %c0_15 = arith.constant 0 : index
    %40 = vector.load %arg5[%c0_14, %c0_15] : memref<32x1xf32, #tpu.memory_space<vmem>>, vector<32x1xf32>
    %41 = vector.broadcast %40 : vector<32x1xf32> to vector<32x128xf32>
    %42 = arith.mulf %39, %41 : vector<32x128xf32>
    %c0_16 = arith.constant 0 : index
    %c0_17 = arith.constant 0 : index
    %43 = vector.load %arg6[%c0_16, %c0_17] : memref<32x1xf32, #tpu.memory_space<vmem>>, vector<32x1xf32>
    %44 = vector.broadcast %43 : vector<32x1xf32> to vector<32x128xf32>
    %45 = arith.addf %42, %44 : vector<32x128xf32>
    %cst_18 = arith.constant 0.000000e+00 : f32
    %46 = vector.broadcast %cst_18 : f32 to vector<32x128xf32>
    %47 = arith.maximumf %45, %46 : vector<32x128xf32>
    %48 = arith.truncf %47 : vector<32x128xf32> to vector<32x128xbf16>
    %c0_19 = arith.constant 0 : index
    %c0_20 = arith.constant 0 : index
    %c0_21 = arith.constant 0 : index
    %49 = vector.load %arg7[%c0_19, %c0_20, %c0_21] : memref<1x32x128xbf16, #tpu.memory_space<vmem>>, vector<1x32x128xbf16>
    %50 = vector.shape_cast %49 : vector<1x32x128xbf16> to vector<32x128xbf16>
    %51 = vector.shape_cast %48 : vector<32x128xbf16> to vector<1x32x128xbf16>
    tpu.vector_store %arg7[%c0_19, %c0_20, %c0_21], %51 {strides = array<i32>} : memref<1x32x128xbf16, #tpu.memory_space<vmem>>, vector<1x32x128xbf16>,
    return
  }
  func.func @transform_0(%arg0: i32, %arg1: i32) -> (i32, i32, i32, i32) {
    %c0_i32 = arith.constant 0 : i32
    %c0_i32_0 = arith.constant 0 : i32
    %c0_i32_1 = arith.constant 0 : i32
    return %arg0, %arg1, %c0_i32, %c0_i32_0 : i32, i32, i32, i32
  }
  func.func @transform_1(%arg0: i32, %arg1: i32) -> (i32, i32, i32) {
    %c0_i32 = arith.constant 0 : i32
    %c0_i32_0 = arith.constant 0 : i32
    %c0_i32_1 = arith.constant 0 : i32
    %c0_i32_2 = arith.constant 0 : i32
    return %c0_i32, %c0_i32_0, %c0_i32_1 : i32, i32, i32
  }
  func.func @transform_2(%arg0: i32, %arg1: i32) -> (i32, i32) {
    %c0_i32 = arith.constant 0 : i32
    %c0_i32_0 = arith.constant 0 : i32
    %c0_i32_1 = arith.constant 0 : i32
    return %c0_i32, %c0_i32_0 : i32, i32
  }
  func.func @transform_3(%arg0: i32, %arg1: i32) -> (i32, i32) {
    %c0_i32 = arith.constant 0 : i32
    %c0_i32_0 = arith.constant 0 : i32
    %c0_i32_1 = arith.constant 0 : i32
    return %c0_i32, %c0_i32_0 : i32, i32
  }
  func.func @transform_4(%arg0: i32, %arg1: i32) -> (i32, i32) {
    %c0_i32 = arith.constant 0 : i32
    %c0_i32_0 = arith.constant 0 : i32
    %c0_i32_1 = arith.constant 0 : i32
    return %c0_i32, %c0_i32_0 : i32, i32
  }
  func.func @transform_5(%arg0: i32, %arg1: i32) -> (i32, i32, i32) {
    %c0_i32 = arith.constant 0 : i32
    %c0_i32_0 = arith.constant 0 : i32
    return %arg0, %c0_i32, %arg1 : i32, i32, i32
  }
}

</mosaic_0001>

<llo_original>
// kernel: tile.18
$region0: #{tile.18}
  #allocation0 [shape = 's32[1]{0}', space=sflag, size = 0x4, scoped, tag = 'scoped memory for tile.18']
  %s0 = inlined_call_operand.vmem [shape: f32[8], index: 0, kind: input, shape index: {}]
  %s1 = inlined_call_operand.vmem [shape: f32[4,8], index: 1, kind: output, shape index: {}]
  // Predicated region
  $region2: #{tile.18} parent=0 // pred_check
    _
  $region3: #{tile.18} parent=0 // pred_check_branch
    %3 = sbr.rel (0) target = $region5
  $region4: #{tile.18} parent=0 // pred_region
    _
  $region5: #{tile.18} parent=0 // pred_fallthru
    _
  %v4 = vld [vmem:[%s0] ss:$0 sm:$0xff]
  %5 = vst [vmem:[%s1] sm:$0xf] %v4

// kernel: tile.0
$region0: #{tile.0}
  %s0 = inlined_call_operand.vmem [shape: f32[4,8], index: 0, kind: input, shape index: {}]
  %s1 = inlined_call_operand.vmem [shape: f32[32,1], index: 1, kind: output, shape index: {}]
  $region1: #{tile.0} parent=0
    #allocation0 [shape = 'u8[4096]{0}', space=vmem, size = 0x1000, scoped, tag = 'scoped mem for input reshape']
    %s3 = sshll.u32 1, 4
    %s4 = ssub.s32 %s3, 1
    %v5 = vld [vmem:[%s0] sm:%s4]
    %6 = vst [vmem:[#allocation0] sm:%s4] %v5
    %v7 = vld [vmem:[#allocation0] sm:$0xf]
    %vm8 = vcmask 7168
    %9 = vst.msk [vmem:[%s1] ss:$8 sm:$0xf] %vm8, %v7
    %v10 = vld [vmem:[#allocation0] sm:$0xf]
    %11 = vrot.lane.b32.xlu0 %v10, 127
    %v12 = vpop.permute.xlu0 %11
    %vm13 = vcmask 7168
    %s14 = scalar_lea.vmem %s1, 1
    %15 = vst.msk [vmem:[%s14] ss:$8 sm:$0xf] %vm13, %v12
    %v16 = vld [vmem:[#allocation0] sm:$0xf]
    %17 = vrot.lane.b32.xlu0 %v16, 126
    %v18 = vpop.permute.xlu0 %17
    %vm19 = vcmask 7168
    %s20 = scalar_lea.vmem %s1, 2
    %21 = vst.msk [vmem:[%s20] ss:$8 sm:$0xf] %vm19, %v18
    %v22 = vld [vmem:[#allocation0] sm:$0xf]
    %23 = vrot.lane.b32.xlu0 %v22, 125
    %v24 = vpop.permute.xlu0 %23
    %vm25 = vcmask 7168
    %s26 = scalar_lea.vmem %s1, 3
    %27 = vst.msk [vmem:[%s26] ss:$8 sm:$0xf] %vm25, %v24
    %v28 = vld [vmem:[#allocation0] sm:$0xf]
    %29 = vrot.lane.b32.xlu0 %v28, 124
    %v30 = vpop.permute.xlu0 %29
    %vm31 = vcmask 7168
    %s32 = scalar_lea.vmem %s1, 4
    %33 = vst.msk [vmem:[%s32] ss:$8 sm:$0xf] %vm31, %v30
    %v34 = vld [vmem:[#allocation0] sm:$0xf]
    %35 = vrot.lane.b32.xlu0 %v34, 123
    %v36 = vpop.permute.xlu0 %35
    %vm37 = vcmask 7168
    %s38 = scalar_lea.vmem %s1, 5
    %39 = vst.msk [vmem:[%s38] ss:$8 sm:$0xf] %vm37, %v36
    %v40 = vld [vmem:[#allocation0] sm:$0xf]
    %41 = vrot.lane.b32.xlu0 %v40, 122
    %v42 = vpop.permute.xlu0 %41
    %vm43 = vcmask 7168
    %s44 = scalar_lea.vmem %s1, 6
    %45 = vst.msk [vmem:[%s44] ss:$8 sm:$0xf] %vm43, %v42
    %v46 = vld [vmem:[#allocation0] sm:$0xf]
    %47 = vrot.lane.b32.xlu0 %v46, 121
    %v48 = vpop.permute.xlu0 %47
    %vm49 = vcmask 7168
    %s50 = scalar_lea.vmem %s1, 7
    %51 = vst.msk [vmem:[%s50] ss:$8 sm:$0xf] %vm49, %v48

// kernel: up_conv_forward.1
$region0: #{up_conv_forward.1}
  #allocation0 [shape = 'u32[]', space=smem, size = 0x4, offset = 0x4, fixed_abs, tag = 'smem constant byte address 0x4 - core index']
  #allocation1 [shape = 'u32[144,128]{1,0:T(1,128)}', space=vmem, size = 0x12000, scoped, tag = 'internal scratch']
  %s0 = inlined_call_operand.vmem [shape: bf16[2,2,16,162], index: 0, kind: input, shape index: {}]
  %s1 = inlined_call_operand.vmem [shape: bf16[3,32,48], index: 1, kind: input, shape index: {}]
  %s2 = inlined_call_operand.vmem [shape: bf16[2,128], index: 2, kind: input, shape index: {}]
  %s3 = inlined_call_operand.vmem [shape: f32[32,1], index: 3, kind: input, shape index: {}]
  %s4 = inlined_call_operand.vmem [shape: f32[32,1], index: 4, kind: input, shape index: {}]
  %s5 = inlined_call_operand.vmem [shape: bf16[2,32,256], index: 5, kind: output, shape index: {}]
  %s6 = sld [smem:[#allocation0]]
  $region90: #{up_conv_forward.1} parent=0
    _
  %s8 = ssub.s32 1, %s6
  %s9 = scalar_select 0, %s8, %s6
  $region1: #{up_conv_forward.1} parent=0
    #allocation2 [shape = 'u8[16384]{0}', space=vmem, size = 0x4000, scoped, tag = 'output window, operand 0']
    loop: start=0, step=1, limit=6
    $region2: #{up_conv_forward.1} parent=1 // loop_pre_header
      _
    $region3: #{up_conv_forward.1} parent=1 // loop_header
      %s11 = sphi 0, %s15
      %p12 = scmp.ge.s32.totalorder %s11, 6
      %s18 = sphi 0, %s30
      %s19 = sphi 0, %s26
      %s20 = sphi 0, %s18
      %s21 = sphi 0, %s19
      %s22 = sphi 0, %s20
      %s23 = sphi 0, %s21
      %s35 = sphi 0, %s37
      %s38 = sphi 0, %s35
      %s39 = sphi 0, %s38
      %s55 = sphi 0, %s39
      %s59 = sphi 0, %s59
      %s61 = sphi 0, %s59
      %s62 = sphi 0, %s61
      %s76 = sphi 0, %s62
      %s80 = sphi 0, %s80
      %s82 = sphi 0, %s80
      %s83 = sphi 0, %s82
      %s97 = sphi 0, %s83
      %s101 = sphi 0, %s101
      %s103 = sphi 0, %s101
      %s104 = sphi 0, %s103
      %s118 = sphi 0, %s104
      %s122 = sphi 0, %s122
      %s124 = sphi 0, %s122
      %s125 = sphi 0, %s124
      %s139 = sphi 0, %s125
      %s147 = sphi 0, %s149
      %s150 = sphi 0, %s147
      %s151 = sphi 0, %s150
      %s167 = sphi 0, %s151
    $region4: #{up_conv_forward.1} parent=1 // loop_header_branch
      %14 = sbr.rel (%p12) target = $region8
    $region5: #{up_conv_forward.1} parent=1 // loop_body
      %s16 = ssub.s32 %s11, 1
      %s17 = ssub.s32 %s11, 2
      %s24 = sadd.s32 1, %s19
      %p25 = scmp.ge.s32.totalorder %s24, 2
      %s26 = scalar_select %p25, 0, %s24
      %s27 = sadd.s32 1, %s18
      %s28 = scalar_select %p25, %s27, %s18
      %p29 = scmp.ge.s32.totalorder %s28, 2
      %s30 = scalar_select %p29, 0, %s28
      %s31 = ssub.s32 %s18, %s30
      %s32 = ssub.s32 %s19, %s26
      %s33 = sor.u32 %s31, %s32
      %p34 = scmp.eq.s32.totalorder %s33, 0
      %s36 = sadd.s32 %s35, 1
      %s37 = scalar_select %p34, %s35, %s36
      %p40 = pneg %p34
      %p41 = scmp.eq.s32.totalorder %s11, 3
      %p42 = por %p40, %p41
      %p43 = scmp.ne.s32.totalorder %s35, %s38
      %p44 = scmp.eq.s32.totalorder %s11, 0
      %p45 = por %p43, %p44
      %p46 = scmp.ne.s32.totalorder %s35, %s38
      %p47 = scmp.eq.s32.totalorder %s16, 3
      %p48 = por %p46, %p47
      %p49 = scmp.ne.s32.totalorder %s38, %s39
      %p50 = scmp.eq.s32.totalorder %s16, 0
      %p51 = por %p49, %p50
      %p52 = scmp.ne.s32.totalorder %s38, %s39
      %p53 = scmp.eq.s32.totalorder %s17, 3
      %p54 = por %p52, %p53
      %p56 = scmp.ne.s32.totalorder %s39, %s55
      %p57 = scmp.eq.s32.totalorder %s17, 0
      %p58 = por %p56, %p57
      %s60 = sadd.s32 %s59, 1
      %p63 = scmp.eq.s32.totalorder %s11, 3
      %p64 = scmp.ne.s32.totalorder %s59, %s61
      %p65 = scmp.eq.s32.totalorder %s11, 0
      %p66 = por %p64, %p65
      %p67 = scmp.ne.s32.totalorder %s59, %s61
      %p68 = scmp.eq.s32.totalorder %s16, 3
      %p69 = por %p67, %p68
      %p70 = scmp.ne.s32.totalorder %s61, %s62
      %p71 = scmp.eq.s32.totalorder %s16, 0
      %p72 = por %p70, %p71
      %p73 = scmp.ne.s32.totalorder %s61, %s62
      %p74 = scmp.eq.s32.totalorder %s17, 3
      %p75 = por %p73, %p74
      %p77 = scmp.ne.s32.totalorder %s62, %s76
      %p78 = scmp.eq.s32.totalorder %s17, 0
      %p79 = por %p77, %p78
      %s81 = sadd.s32 %s80, 1
      %p84 = scmp.eq.s32.totalorder %s11, 3
      %p85 = scmp.ne.s32.totalorder %s80, %s82
      %p86 = scmp.eq.s32.totalorder %s11, 0
      %p87 = por %p85, %p86
      %p88 = scmp.ne.s32.totalorder %s80, %s82
      %p89 = scmp.eq.s32.totalorder %s16, 3
      %p90 = por %p88, %p89
      %p91 = scmp.ne.s32.totalorder %s82, %s83
      %p92 = scmp.eq.s32.totalorder %s16, 0
      %p93 = por %p91, %p92
      %p94 = scmp.ne.s32.totalorder %s82, %s83
      %p95 = scmp.eq.s32.totalorder %s17, 3
      %p96 = por %p94, %p95
      %p98 = scmp.ne.s32.totalorder %s83, %s97
      %p99 = scmp.eq.s32.totalorder %s17, 0
      %p100 = por %p98, %p99
      %s102 = sadd.s32 %s101, 1
      %p105 = scmp.eq.s32.totalorder %s11, 3
      %p106 = scmp.ne.s32.totalorder %s101, %s103
      %p107 = scmp.eq.s32.totalorder %s11, 0
      %p108 = por %p106, %p107
      %p109 = scmp.ne.s32.totalorder %s101, %s103
      %p110 = scmp.eq.s32.totalorder %s16, 3
      %p111 = por %p109, %p110
      %p112 = scmp.ne.s32.totalorder %s103, %s104
      %p113 = scmp.eq.s32.totalorder %s16, 0
      %p114 = por %p112, %p113
      %p115 = scmp.ne.s32.totalorder %s103, %s104
      %p116 = scmp.eq.s32.totalorder %s17, 3
      %p117 = por %p115, %p116
      %p119 = scmp.ne.s32.totalorder %s104, %s118
      %p120 = scmp.eq.s32.totalorder %s17, 0
      %p121 = por %p119, %p120
      %s123 = sadd.s32 %s122, 1
      %p126 = scmp.eq.s32.totalorder %s11, 3
      %p127 = scmp.ne.s32.totalorder %s122, %s124
      %p128 = scmp.eq.s32.totalorder %s11, 0
      %p129 = por %p127, %p128
      %p130 = scmp.ne.s32.totalorder %s122, %s124
      %p131 = scmp.eq.s32.totalorder %s16, 3
      %p132 = por %p130, %p131
      %p133 = scmp.ne.s32.totalorder %s124, %s125
      %p134 = scmp.eq.s32.totalorder %s16, 0
      %p135 = por %p133, %p134
      %p136 = scmp.ne.s32.totalorder %s124, %s125
      %p137 = scmp.eq.s32.totalorder %s17, 3
      %p138 = por %p136, %p137
      %p140 = scmp.ne.s32.totalorder %s125, %s139
      %p141 = scmp.eq.s32.totalorder %s17, 0
      %p142 = por %p140, %p141
      %s143 = ssub.s32 %s18, %s30
      %s144 = ssub.s32 %s19, %s26
      %s145 = sor.u32 %s143, %s144
      %p146 = scmp.eq.s32.totalorder %s145, 0
      %s148 = sadd.s32 %s147, 1
      %s149 = scalar_select %p146, %s147, %s148
      %p152 = pneg %p146
      %p153 = scmp.eq.s32.totalorder %s11, 3
      %p154 = por %p152, %p153
      %p155 = scmp.ne.s32.totalorder %s147, %s150
      %p156 = scmp.eq.s32.totalorder %s11, 0
      %p157 = por %p155, %p156
      %p158 = scmp.ne.s32.totalorder %s147, %s150
      %p159 = scmp.eq.s32.totalorder %s16, 3
      %p160 = por %p158, %p159
      %p161 = scmp.ne.s32.totalorder %s150, %s151
      %p162 = scmp.eq.s32.totalorder %s16, 0
      %p163 = por %p161, %p162
      %p164 = scmp.ne.s32.totalorder %s150, %s151
      %p165 = scmp.eq.s32.totalorder %s17, 3
      %p166 = por %p164, %p165
      %p168 = scmp.ne.s32.totalorder %s151, %s167
      %p169 = scmp.eq.s32.totalorder %s17, 0
      %p170 = por %p168, %p169
      %p171 = scmp.le.s32.totalorder 1, %s11
      %p172 = scmp.lt.s32.totalorder %s11, 5
      %p173 = pnand %p171, %p172
      %p174 = pneg %p173
      // Predicated region
      $region9: #{up_conv_forward.1} parent=5 // pred_check
        _
      $region10: #{up_conv_forward.1} parent=5 // pred_check_branch
        %176 = sbr.rel (%p173) target = $region12
      $region11: #{up_conv_forward.1} parent=5 // pred_region
        %s177 = ssub.s32 %s11, 1
        // Predicated region
        $region13: #{up_conv_forward.1} parent=11 // pred_check
          %p178 = pneg %p72
        $region14: #{up_conv_forward.1} parent=11 // pred_check_branch
          %180 = sbr.rel (%p178) target = $region16
        $region15: #{up_conv_forward.1} parent=11 // pred_region
          _
        $region16: #{up_conv_forward.1} parent=11 // pred_fallthru
          _
        // Predicated region
        $region17: #{up_conv_forward.1} parent=11 // pred_check
          %p181 = pneg %p93
        $region18: #{up_conv_forward.1} parent=11 // pred_check_branch
          %183 = sbr.rel (%p181) target = $region20
        $region19: #{up_conv_forward.1} parent=11 // pred_region
          _
        $region20: #{up_conv_forward.1} parent=11 // pred_fallthru
          _
        // Predicated region
        $region21: #{up_conv_forward.1} parent=11 // pred_check
          %p184 = pneg %p114
        $region22: #{up_conv_forward.1} parent=11 // pred_check_branch
          %186 = sbr.rel (%p184) target = $region24
        $region23: #{up_conv_forward.1} parent=11 // pred_region
          _
        $region24: #{up_conv_forward.1} parent=11 // pred_fallthru
          _
        // Predicated region
        $region25: #{up_conv_forward.1} parent=11 // pred_check
          %p187 = pneg %p135
        $region26: #{up_conv_forward.1} parent=11 // pred_check_branch
          %189 = sbr.rel (%p187) target = $region28
        $region27: #{up_conv_forward.1} parent=11 // pred_region
          _
        $region28: #{up_conv_forward.1} parent=11 // pred_fallthru
          _
      $region12: #{up_conv_forward.1} parent=5 // pred_fallthru
        _
      %p190 = scmp.lt.s32.totalorder %s11, 4
      // Predicated region
      $region29: #{up_conv_forward.1} parent=5 // pred_check
        %p191 = pneg %p190
      $region30: #{up_conv_forward.1} parent=5 // pred_check_branch
        %193 = sbr.rel (%p191) target = $region32
      $region31: #{up_conv_forward.1} parent=5 // pred_region
        // Predicated region
        $region33: #{up_conv_forward.1} parent=31 // pred_check
          %p194 = pneg %p45
        $region34: #{up_conv_forward.1} parent=31 // pred_check_branch
          %196 = sbr.rel (%p194) target = $region36
        $region35: #{up_conv_forward.1} parent=31 // pred_region
          %p197 = scmp.lt.s32.totalorder %s18, 1
          %s198 = scalar_select %p197, %s18, 1
          %p199 = scmp.lt.s32.totalorder %s19, 1
          %s200 = scalar_select %p199, %s19, 1
          %s201 = smul.addr %s200, 4
          %s202 = smul.addr %s198, 8
          %s203 = sadd.s32 %s201, %s202
          %s204 = smul.addr %s203, 4
          %s205 = scalar_lea.vmem %s0, %s204
        $region36: #{up_conv_forward.1} parent=31 // pred_fallthru
          _
      $region32: #{up_conv_forward.1} parent=5 // pred_fallthru
        _
      %p206 = scmp.le.s32.totalorder 1, %s11
      %p207 = scmp.lt.s32.totalorder %s11, 5
      %p208 = pnand %p206, %p207
      %p209 = pneg %p208
      // Predicated region
      $region37: #{up_conv_forward.1} parent=5 // pred_check
        _
      $region38: #{up_conv_forward.1} parent=5 // pred_check_branch
        %211 = sbr.rel (%p208) target = $region40
      $region39: #{up_conv_forward.1} parent=5 // pred_region
        %s212 = ssub.s32 %s11, 1
        %p213 = scmp.lt.s32.totalorder %s20, 1
        %s214 = scalar_select %p213, %s20, 1
        %p215 = scmp.lt.s32.totalorder %s21, 1
        %s216 = scalar_select %p215, %s21, 1
        %s217 = smul.addr %s216, 4
        %s218 = smul.addr %s214, 8
        %s219 = sadd.s32 %s217, %s218
        %s220 = smul.addr %s219, 4
        %s221 = scalar_lea.vmem %s0, %s220
        %p222 = pneg %p51
        %p223 = pneg %p48
        %p224 = pneg %p72
        %p225 = pneg %p69
        %p226 = pneg %p93
        %p227 = pneg %p90
        %p228 = pneg %p114
        %p229 = pneg %p111
        %p230 = pneg %p135
        %p231 = pneg %p132
        %p232 = pneg %p163
        %p233 = pneg %p160
        %s234 = sand.u32 %s150, 1
        %s235 = sand.u32 %s150, 1
        %s236 = smul.addr %s235, 16
        %s237 = scalar_lea.vmem [#allocation2], %s236
        %p238 = scmp.lt.s32.totalorder %s20, 1
        %s239 = scalar_select %p238, %s20, 1
        %p240 = scmp.lt.s32.totalorder %s21, 1
        %s241 = scalar_select %p240, %s21, 1
        %s242 = smul.addr %s241, 4
        %s243 = smul.addr %s239, 8
        %s244 = sadd.s32 %s242, %s243
        %s245 = smul.addr %s244, 4
        %s246 = scalar_lea.vmem %s0, %s245
        %v248 = vld [vmem:[%s246] sm:$0xff]
        %v249 = vld [vmem:[%s246 + $0x8] sm:$0xff]
        %v250 = vld [vmem:[%s2] sm:$0x1]
        %v252 = vpack.i.b16 %v250, %v250
        %v254 = vlaneseq
        %v255 = vshrl.u32 %v254, 7
        %v256 = vsub.s32 0, %v255
        %v257 = vrot.slane %v252, %v256
        %v259 = vunpack.c.l.b16 %v257
        %v260 = vpack.c.b16 %v259, %v259
        %v262 = vmul.bf16 %v248, %v260
        %v263 = vmul.bf16 %v249, %v260
        %v264 = vshrl.u32 %v250, 16
        %v265 = vpack.i.b16 %v264, %v264
        %v267 = vlaneseq
        %v268 = vshrl.u32 %v267, 7
        %v269 = vsub.s32 0, %v268
        %v270 = vrot.slane %v265, %v269
        %v272 = vunpack.c.l.b16 %v270
        %v273 = vpack.c.b16 %v272, %v272
        %274 = vrot.lane.b32.xlu0 %v273, 2
        %v275 = vpop.permute.xlu0 %274
        %v276 = vrot.slane %v275, 4
        %vm277 = vcmask 15360
        %v278 = vsel %vm277, %v276, %v275
        %v280 = vmul.bf16 %v248, %v278
        %v281 = vmul.bf16 %v249, %v278
        %v284 = vunpack.c.l.b16 %v262
        %v285 = vunpack.c.l.b16 %v263
        %v286 = vpack.c.b16 %v285, %v284
        %v290 = vunpack.c.l.b16 %v248
        %v291 = vunpack.c.h.b16 %v248
        %v292 = vunpack.c.l.b16 %v249
        %v293 = vunpack.c.h.b16 %v249
        %v294 = vpack.c.b16 %v292, %v290
        %v295 = vpack.c.b16 %v293, %v291
        %296 = vrot.lane.b32.xlu0 %v294, 127
        %v297 = vpop.permute.xlu0 %296
        %298 = vrot.lane.b32.xlu0 %v295, 127
        %v299 = vpop.permute.xlu0 %298
        %vm300 = vcmask 1039360
        %v301 = vsel %vm300, %v297, %v299
        %v305 = vunpack.c.l.b16 %v280
        %v306 = vunpack.c.h.b16 %v280
        %v307 = vunpack.c.l.b16 %v281
        %v308 = vunpack.c.h.b16 %v281
        %v309 = vpack.c.b16 %v307, %v305
        %v310 = vpack.c.b16 %v308, %v306
        %311 = vrot.lane.b32.xlu0 %v309, 126
        %v312 = vpop.permute.xlu0 %311
        %313 = vrot.lane.b32.xlu0 %v310, 126
        %v314 = vpop.permute.xlu0 %313
        %vm315 = vcmask 1031168
        %v316 = vsel %vm315, %v312, %v314
        %v318 = vld [vmem:[%s1] sm:$0xf]
        %v319 = vld [vmem:[%s1 + $0x4] sm:$0xf]
        %v320 = vld [vmem:[%s1 + $0x8] sm:$0xf]
        %v321 = vld [vmem:[%s1 + $0xc] sm:$0xf]
        %322 = vrot.lane.b32.xlu0 %v260, 16
        %v323 = vpop.permute.xlu0 %322
        %v324 = vrot.slane %v323, 4
        %vm325 = vcmask 130048
        %v326 = vsel %vm325, %v324, %v323
        %v328 = vmul.bf16 %v248, %v326
        %v329 = vmul.bf16 %v249, %v326
        %330 = vrot.lane.b32.xlu0 %v273, 18
        %v331 = vpop.permute.xlu0 %330
        %v332 = vrot.slane %v331, 4
        %vm333 = vcmask 146432
        %v334 = vsel %vm333, %v332, %v331
        %v336 = vmul.bf16 %v248, %v334
        %v337 = vmul.bf16 %v249, %v334
        %v340 = vunpack.c.l.b16 %v328
        %v341 = vunpack.c.h.b16 %v328
        %v342 = vunpack.c.l.b16 %v329
        %v343 = vunpack.c.h.b16 %v329
        %v344 = vpack.c.b16 %v342, %v340
        %v345 = vpack.c.b16 %v343, %v341
        %v348 = vunpack.c.l.b16 %v336
        %v349 = vunpack.c.h.b16 %v336
        %v350 = vunpack.c.l.b16 %v337
        %v351 = vunpack.c.h.b16 %v337
        %v352 = vpack.c.b16 %v350, %v348
        %v353 = vpack.c.b16 %v351, %v349
        %354 = vrot.lane.b32.xlu0 %v352, 126
        %v355 = vpop.permute.xlu0 %354
        %356 = vrot.lane.b32.xlu0 %v353, 126
        %v357 = vpop.permute.xlu0 %356
        %v358 = vsel %vm315, %v355, %v357
        %s359 = scalar_lea.vmem %s1, 16
        %v360 = vld [vmem:[%s359] sm:$0xf]
        %v361 = vld [vmem:[%s359 + $0x4] sm:$0xf]
        %v362 = vld [vmem:[%s359 + $0x8] sm:$0xf]
        %v363 = vld [vmem:[%s359 + $0xc] sm:$0xf]
        %v368 = vunpack.c.l.b16 %v360
        %v369 = vunpack.c.l.b16 %v361
        %v370 = vunpack.c.l.b16 %v362
        %v371 = vunpack.c.l.b16 %v363
        %v372 = vpack.c.b16 %v369, %v368
        %v373 = vpack.c.b16 %v371, %v370
        %374 = vrot.lane.b32.xlu0 %v344, 112
        %v375 = vpop.permute.xlu0 %374
        %376 = vrot.lane.b32.xlu0 %v345, 112
        %v377 = vpop.permute.xlu0 %376
        %378 = vrot.lane.b32.xlu0 %v301, 112
        %v379 = vpop.permute.xlu0 %378
        %380 = vrot.lane.b32.xlu0 %v299, 112
        %v381 = vpop.permute.xlu0 %380
        %382 = vrot.lane.b32.xlu0 %v358, 112
        %v383 = vpop.permute.xlu0 %382
        %384 = vrot.lane.b32.xlu0 %v357, 112
        %v385 = vpop.permute.xlu0 %384
        %vm386 = vcmask 916480
        %v387 = vsel %vm386, %v375, %v377
        %v388 = vsel %vm386, %v379, %v381
        %v389 = vsel %vm386, %v383, %v385
        %vm393 = vcmask 392192
        %v395 = vsel %vm393, %v372, 0
        %v398 = vsel %vm393, %v373, 0
        %400 = vmatprep.subr.bf16.mxu0 0
        %401 = vmatpush1.bf16.msra.mxu0 0
        %402 = vmatprep.subr.bf16.mxu0 0
        %403 = vmatpush1.bf16.msra.mxu0 0
        %404 = vmatprep.subr.bf16.mxu0 0
        %405 = vmatpush1.bf16.msra.mxu0 0
        %406 = vmatprep.subr.bf16.mxu0 0
        %407 = vmatpush1.bf16.msra.mxu0 0
        %408 = vmatprep.subr.bf16.mxu0 0
        %409 = vmatpush1.bf16.msra.mxu0 0
        %410 = vmatprep.subr.bf16.mxu0 0
        %411 = vmatpush1.bf16.msra.mxu0 %v389
        %412 = vmatprep.subr.bf16.mxu0 0
        %413 = vmatpush1.bf16.msra.mxu0 %v388
        %414 = vmatprep.subr.bf16.mxu0 0
        %415 = vmatpush1.bf16.msra.mxu0 %v387
        %416 = vmatprep.subr.bf16.mxu0 0
        %417 = vmatpush2.bf16.msra.mxu0 0
        %418 = vmatprep.subr.bf16.mxu0 0
        %419 = vmatpush2.bf16.msra.mxu0 0
        %420 = vmatprep.subr.bf16.mxu0 0
        %421 = vmatpush2.bf16.msra.mxu0 0
        %422 = vmatprep.subr.bf16.mxu0 0
        %423 = vmatpush2.bf16.msra.mxu0 0
        %424 = vmatprep.subr.bf16.mxu0 0
        %425 = vmatpush2.bf16.msra.mxu0 0
        %426 = vmatprep.subr.bf16.mxu0 0
        %427 = vmatpush2.bf16.msra.mxu0 0
        %428 = vmatprep.subr.bf16.mxu0 0
        %429 = vmatpush2.bf16.msra.mxu0 0
        %430 = vmatprep.subr.bf16.mxu0 0
        %431 = vmatpush2.bf16.msra.mxu0 0
        %432 = vmatprep.mubr.bf16.mxu0 0
        %433 = vmatmul.mubr.bf16.gmra.mxu0 %v395
        %v434 = vpop.f32.mrf.mxu0
        %v435 = vadd.f32 0.0, %v434
        %v436 = vpop.f32.mrf.mxu0
        %v437 = vpop.f32.mrf.mxu0
        %v438 = vadd.f32 0.0, %v437
        %v439 = vpop.f32.mrf.mxu0
        %440 = vmatprep.mubr.bf16.mxu0 0
        %441 = vmatmul.mubr.bf16.gmra.mxu0 %v398
        %v442 = vpop.f32.mrf.mxu0
        %v443 = vadd.f32 0.0, %v442
        %v444 = vpop.f32.mrf.mxu0
        %v445 = vpop.f32.mrf.mxu0
        %v446 = vadd.f32 0.0, %v445
        %v447 = vpop.f32.mrf.mxu0
        %448 = vdwg.mxu0
        %v453 = vunpack.c.l.b16 %v318
        %v454 = vunpack.c.l.b16 %v319
        %v455 = vunpack.c.l.b16 %v320
        %v456 = vunpack.c.l.b16 %v321
        %v457 = vpack.c.b16 %v454, %v453
        %v458 = vpack.c.b16 %v456, %v455
        %v460 = vsel %vm393, %v457, 0
        %v463 = vsel %vm393, %v458, 0
        %465 = vmatprep.subr.bf16.mxu0 0
        %466 = vmatpush1.bf16.msra.mxu0 0
        %467 = vmatprep.subr.bf16.mxu0 0
        %468 = vmatpush1.bf16.msra.mxu0 0
        %469 = vmatprep.subr.bf16.mxu0 0
        %470 = vmatpush1.bf16.msra.mxu0 0
        %471 = vmatprep.subr.bf16.mxu0 0
        %472 = vmatpush1.bf16.msra.mxu0 0
        %473 = vmatprep.subr.bf16.mxu0 0
        %474 = vmatpush1.bf16.msra.mxu0 0
        %475 = vmatprep.subr.bf16.mxu0 0
        %476 = vmatpush1.bf16.msra.mxu0 %v316
        %477 = vmatprep.subr.bf16.mxu0 0
        %478 = vmatpush1.bf16.msra.mxu0 %v301
        %479 = vmatprep.subr.bf16.mxu0 0
        %480 = vmatpush1.bf16.msra.mxu0 %v286
        %481 = vmatprep.subr.bf16.mxu0 0
        %482 = vmatpush2.bf16.msra.mxu0 0
        %483 = vmatprep.subr.bf16.mxu0 0
        %484 = vmatpush2.bf16.msra.mxu0 0
        %485 = vmatprep.subr.bf16.mxu0 0
        %486 = vmatpush2.bf16.msra.mxu0 0
        %487 = vmatprep.subr.bf16.mxu0 0
        %488 = vmatpush2.bf16.msra.mxu0 0
        %489 = vmatprep.subr.bf16.mxu0 0
        %490 = vmatpush2.bf16.msra.mxu0 0
        %491 = vmatprep.subr.bf16.mxu0 0
        %492 = vmatpush2.bf16.msra.mxu0 0
        %493 = vmatprep.subr.bf16.mxu0 0
        %494 = vmatpush2.bf16.msra.mxu0 0
        %495 = vmatprep.subr.bf16.mxu0 0
        %496 = vmatpush2.bf16.msra.mxu0 0
        %497 = vmatprep.mubr.bf16.mxu0 0
        %498 = vmatmul.mubr.bf16.gmra.mxu0 %v460
        %v499 = vpop.f32.mrf.mxu0
        %v500 = vadd.f32 %v435, %v499
        %v501 = vpop.f32.mrf.mxu0
        %v502 = vpop.f32.mrf.mxu0
        %v503 = vadd.f32 %v438, %v502
        %v504 = vpop.f32.mrf.mxu0
        %505 = vmatprep.mubr.bf16.mxu0 0
        %506 = vmatmul.mubr.bf16.gmra.mxu0 %v463
        %v507 = vpop.f32.mrf.mxu0
        %v508 = vadd.f32 %v443, %v507
        %v509 = vpop.f32.mrf.mxu0
        %v510 = vpop.f32.mrf.mxu0
        %v511 = vadd.f32 %v446, %v510
        %v512 = vpop.f32.mrf.mxu0
        %513 = vdwg.mxu0
        %514 = vrot.lane.b32.xlu0 %v260, 32
        %v515 = vpop.permute.xlu0 %514
        %v516 = vrot.slane %v515, 4
        %vm517 = vcmask 261120
        %v518 = vsel %vm517, %v516, %v515
        %v520 = vmul.bf16 %v248, %v518
        %v521 = vmul.bf16 %v249, %v518
        %522 = vrot.lane.b32.xlu0 %v273, 34
        %v523 = vpop.permute.xlu0 %522
        %v524 = vrot.slane %v523, 4
        %vm525 = vcmask 277504
        %v526 = vsel %vm525, %v524, %v523
        %v528 = vmul.bf16 %v248, %v526
        %v529 = vmul.bf16 %v249, %v526
        %v532 = vunpack.c.l.b16 %v520
        %v533 = vunpack.c.h.b16 %v520
        %v534 = vunpack.c.l.b16 %v521
        %v535 = vunpack.c.h.b16 %v521
        %v536 = vpack.c.b16 %v534, %v532
        %v537 = vpack.c.b16 %v535, %v533
        %v540 = vunpack.c.l.b16 %v528
        %v541 = vunpack.c.h.b16 %v528
        %v542 = vunpack.c.l.b16 %v529
        %v543 = vunpack.c.h.b16 %v529
        %v544 = vpack.c.b16 %v542, %v540
        %v545 = vpack.c.b16 %v543, %v541
        %546 = vrot.lane.b32.xlu0 %v544, 126
        %v547 = vpop.permute.xlu0 %546
        %548 = vrot.lane.b32.xlu0 %v545, 126
        %v549 = vpop.permute.xlu0 %548
        %v550 = vsel %vm315, %v547, %v549
        %s551 = scalar_lea.vmem %s1, 32
        %v552 = vld [vmem:[%s551] sm:$0xf]
        %v553 = vld [vmem:[%s551 + $0x4] sm:$0xf]
        %v554 = vld [vmem:[%s551 + $0x8] sm:$0xf]
        %v555 = vld [vmem:[%s551 + $0xc] sm:$0xf]
        %v560 = vunpack.c.l.b16 %v552
        %v561 = vunpack.c.l.b16 %v553
        %v562 = vunpack.c.l.b16 %v554
        %v563 = vunpack.c.l.b16 %v555
        %v564 = vpack.c.b16 %v561, %v560
        %v565 = vpack.c.b16 %v563, %v562
        %566 = vrot.lane.b32.xlu0 %v536, 96
        %v567 = vpop.permute.xlu0 %566
        %568 = vrot.lane.b32.xlu0 %v537, 96
        %v569 = vpop.permute.xlu0 %568
        %570 = vrot.lane.b32.xlu0 %v301, 96
        %v571 = vpop.permute.xlu0 %570
        %572 = vrot.lane.b32.xlu0 %v299, 96
        %v573 = vpop.permute.xlu0 %572
        %574 = vrot.lane.b32.xlu0 %v550, 96
        %v575 = vpop.permute.xlu0 %574
        %576 = vrot.lane.b32.xlu0 %v549, 96
        %v577 = vpop.permute.xlu0 %576
        %vm578 = vcmask 785408
        %v579 = vsel %vm578, %v567, %v569
        %v580 = vsel %vm578, %v571, %v573
        %v581 = vsel %vm578, %v575, %v577
        %v586 = vsel %vm393, %v564, 0
        %v589 = vsel %vm393, %v565, 0
        %591 = vmatprep.subr.bf16.mxu0 0
        %592 = vmatpush1.bf16.msra.mxu0 0
        %593 = vmatprep.subr.bf16.mxu0 0
        %594 = vmatpush1.bf16.msra.mxu0 0
        %595 = vmatprep.subr.bf16.mxu0 0
        %596 = vmatpush1.bf16.msra.mxu0 0
        %597 = vmatprep.subr.bf16.mxu0 0
        %598 = vmatpush1.bf16.msra.mxu0 0
        %599 = vmatprep.subr.bf16.mxu0 0
        %600 = vmatpush1.bf16.msra.mxu0 0
        %601 = vmatprep.subr.bf16.mxu0 0
        %602 = vmatpush1.bf16.msra.mxu0 %v581
        %603 = vmatprep.subr.bf16.mxu0 0
        %604 = vmatpush1.bf16.msra.mxu0 %v580
        %605 = vmatprep.subr.bf16.mxu0 0
        %606 = vmatpush1.bf16.msra.mxu0 %v579
        %607 = vmatprep.subr.bf16.mxu0 0
        %608 = vmatpush2.bf16.msra.mxu0 0
        %609 = vmatprep.subr.bf16.mxu0 0
        %610 = vmatpush2.bf16.msra.mxu0 0
        %611 = vmatprep.subr.bf16.mxu0 0
        %612 = vmatpush2.bf16.msra.mxu0 0
        %613 = vmatprep.subr.bf16.mxu0 0
        %614 = vmatpush2.bf16.msra.mxu0 0
        %615 = vmatprep.subr.bf16.mxu0 0
        %616 = vmatpush2.bf16.msra.mxu0 0
        %617 = vmatprep.subr.bf16.mxu0 0
        %618 = vmatpush2.bf16.msra.mxu0 0
        %619 = vmatprep.subr.bf16.mxu0 0
        %620 = vmatpush2.bf16.msra.mxu0 0
        %621 = vmatprep.subr.bf16.mxu0 0
        %622 = vmatpush2.bf16.msra.mxu0 0
        %623 = vmatprep.mubr.bf16.mxu0 0
        %624 = vmatmul.mubr.bf16.gmra.mxu0 %v586
        %v625 = vpop.f32.mrf.mxu0
        %v626 = vadd.f32 0.0, %v625
        %v627 = vpop.f32.mrf.mxu0
        %v628 = vpop.f32.mrf.mxu0
        %v629 = vadd.f32 0.0, %v628
        %v630 = vpop.f32.mrf.mxu0
        %631 = vmatprep.mubr.bf16.mxu0 0
        %632 = vmatmul.mubr.bf16.gmra.mxu0 %v589
        %v633 = vpop.f32.mrf.mxu0
        %v634 = vadd.f32 0.0, %v633
        %v635 = vpop.f32.mrf.mxu0
        %v636 = vpop.f32.mrf.mxu0
        %v637 = vadd.f32 0.0, %v636
        %v638 = vpop.f32.mrf.mxu0
        %639 = vdwg.mxu0
        %v640 = vadd.f32 %v500, %v626
        %v641 = vadd.f32 %v503, %v629
        %v642 = vadd.f32 %v508, %v634
        %v643 = vadd.f32 %v511, %v637
        %v644 = vld [vmem:[%s3] sm:$0xff]
        %v645 = vld [vmem:[%s3 + $0x8] sm:$0xff]
        %v646 = vld [vmem:[%s3 + $0x10] sm:$0xff]
        %v647 = vld [vmem:[%s3 + $0x18] sm:$0xff]
        %649 = vset.pattern.permute.xlu0 0
        %650 = vperm.xlu0 %649, %v644
        %v651 = vpop.permute.xlu0 %650
        %654 = vset.pattern.permute.xlu0 0
        %655 = vperm.xlu0 %654, %v645
        %v656 = vpop.permute.xlu0 %655
        %659 = vset.pattern.permute.xlu0 0
        %660 = vperm.xlu0 %659, %v646
        %v661 = vpop.permute.xlu0 %660
        %664 = vset.pattern.permute.xlu0 0
        %665 = vperm.xlu0 %664, %v647
        %v666 = vpop.permute.xlu0 %665
        %v668 = vmul.f32 %v640, %v651
        %v669 = vmul.f32 %v641, %v656
        %v670 = vmul.f32 %v642, %v661
        %v671 = vmul.f32 %v643, %v666
        %v672 = vld [vmem:[%s4] sm:$0xff]
        %v673 = vld [vmem:[%s4 + $0x8] sm:$0xff]
        %v674 = vld [vmem:[%s4 + $0x10] sm:$0xff]
        %v675 = vld [vmem:[%s4 + $0x18] sm:$0xff]
        %677 = vset.pattern.permute.xlu0 0
        %678 = vperm.xlu0 %677, %v672
        %v679 = vpop.permute.xlu0 %678
        %682 = vset.pattern.permute.xlu0 0
        %683 = vperm.xlu0 %682, %v673
        %v684 = vpop.permute.xlu0 %683
        %687 = vset.pattern.permute.xlu0 0
        %688 = vperm.xlu0 %687, %v674
        %v689 = vpop.permute.xlu0 %688
        %692 = vset.pattern.permute.xlu0 0
        %693 = vperm.xlu0 %692, %v675
        %v694 = vpop.permute.xlu0 %693
        %v696 = vadd.f32 %v668, %v679
        %v697 = vadd.f32 %v669, %v684
        %v698 = vadd.f32 %v670, %v689
        %v699 = vadd.f32 %v671, %v694
        %v700 = vmax.f32 %v696, 0.0
        %v701 = vmax.f32 %v697, 0.0
        %v702 = vmax.f32 %v698, 0.0
        %v703 = vmax.f32 %v699, 0.0
        %v704 = vpack.c.bf16 %v701, %v700
        %v705 = vpack.c.bf16 %v703, %v702
        %v708 = vunpack.c.l.b16 %v704
        %v709 = vunpack.c.h.b16 %v704
        %v710 = vunpack.c.l.b16 %v705
        %v711 = vunpack.c.h.b16 %v705
        %v712 = vpack.c.b16 %v708, %v708
        %v713 = vpack.c.b16 %v709, %v709
        %v714 = vpack.c.b16 %v710, %v710
        %v715 = vpack.c.b16 %v711, %v711
        %720 = vst [vmem:[%s237] sm:$0xf] %v712
        %721 = vst [vmem:[%s237 + $0x4] sm:$0xf] %v713
        %722 = vst [vmem:[%s237 + $0x8] sm:$0xf] %v714
        %723 = vst [vmem:[%s237 + $0xc] sm:$0xf] %v715
        %s724 = sand.u32 %s150, 1
        %s725 = sand.u32 %s150, 1
        %s726 = smul.addr %s725, 16
        %s727 = scalar_lea.vmem [#allocation2], %s726
        // Predicated region
        $region41: #{up_conv_forward.1} parent=39 // pred_check
          %p728 = pneg %p160
        $region42: #{up_conv_forward.1} parent=39 // pred_check_branch
          %730 = sbr.rel (%p728) target = $region44
        $region43: #{up_conv_forward.1} parent=39 // pred_region
          %s731 = smul.addr %s20, 8
          %s732 = sadd.s32 %s21, %s731
          %s733 = smul.addr %s732, 4
          %s734 = scalar_lea.vmem %s5, %s733
          // Predicated region
          $region45: #{up_conv_forward.1} parent=43 // pred_check
            _
          $region46: #{up_conv_forward.1} parent=43 // pred_check_branch
            %736 = sbr.rel (0) target = $region48
          $region47: #{up_conv_forward.1} parent=43 // pred_region
            // Predicated region
            $region49: #{up_conv_forward.1} parent=47 // pred_check
              _
            $region50: #{up_conv_forward.1} parent=47 // pred_check_branch
              %738 = sbr.rel target = $region52
            $region51: #{up_conv_forward.1} parent=47 // pred_region
              // Predicated region
              $region64: #{up_conv_forward.1} parent=51 // pred_check
                _
              $region65: #{up_conv_forward.1} parent=51 // pred_check_branch
                %760 = sbr.rel (0) target = $region67
              $region66: #{up_conv_forward.1} parent=51 // pred_region
                loop: start=0, step=1, limit=1
                $region68: #{up_conv_forward.1} parent=66 // loop_pre_header
                  _
                $region69: #{up_conv_forward.1} parent=66 // loop_header
                  %s762 = sphi 0, %s766
                  %p763 = scmp.ge.s32.totalorder %s762, 1
                  %s767 = sphi %s727, %s727
                  %s768 = sphi %s734, %s734
                $region70: #{up_conv_forward.1} parent=66 // loop_header_branch
                  %765 = sbr.rel (%p763) target = $region74
                $region71: #{up_conv_forward.1} parent=66 // loop_body
                  _
                $region72: #{up_conv_forward.1} parent=66 // loop_footer
                  %s766 = sadd.s32 1, %s762
                $region73: #{up_conv_forward.1} parent=66 // loop_footer_branch
                  %761 = sbr.rel target = $region69
                $region74: #{up_conv_forward.1} parent=66 // loop_exit
                  _
                %s770 = ssub.s32 16, 1
                loop: start=0, step=1, limit=1
                $region75: #{up_conv_forward.1} parent=66 // loop_pre_header
                  _
                $region76: #{up_conv_forward.1} parent=66 // loop_header
                  %s772 = sphi 0, %s776
                  %p773 = scmp.ge.s32.totalorder %s772, 1
                  %s777 = sphi %s727, %s727
                  %s778 = sphi %s734, %s734
                $region77: #{up_conv_forward.1} parent=66 // loop_header_branch
                  %775 = sbr.rel (%p773) target = $region81
                $region78: #{up_conv_forward.1} parent=66 // loop_body
                  %v779 = vld [vmem:[%s777] sm:%s770]
                  %780 = vst [vmem:[%s778] sm:%s770] %v779
                  %v781 = vld [vmem:[%s777 + $0x4] sm:%s770]
                  %782 = vst [vmem:[%s778 + $0x8] sm:%s770] %v781
                  %v783 = vld [vmem:[%s777 + $0x8] sm:%s770]
                  %784 = vst [vmem:[%s778 + $0x10] sm:%s770] %v783
                  %v785 = vld [vmem:[%s777 + $0xc] sm:%s770]
                  %786 = vst [vmem:[%s778 + $0x18] sm:%s770] %v785
                $region79: #{up_conv_forward.1} parent=66 // loop_footer
                  %s776 = sadd.s32 1, %s772
                $region80: #{up_conv_forward.1} parent=66 // loop_footer_branch
                  %771 = sbr.rel target = $region76
                $region81: #{up_conv_forward.1} parent=66 // loop_exit
                  _
              $region67: #{up_conv_forward.1} parent=51 // pred_fallthru
                _
            $region52: #{up_conv_forward.1} parent=47 // pred_fallthru
              _
            // Predicated region
            $region53: #{up_conv_forward.1} parent=47 // pred_check
              _
            $region54: #{up_conv_forward.1} parent=47 // pred_check_branch
              %740 = sbr.rel (0) target = $region56
            $region55: #{up_conv_forward.1} parent=47 // pred_region
              %s742 = ssub.s32 16, 1
              loop: start=0, step=1, limit=1
              $region57: #{up_conv_forward.1} parent=55 // loop_pre_header
                _
              $region58: #{up_conv_forward.1} parent=55 // loop_header
                %s744 = sphi 0, %s748
                %p745 = scmp.ge.s32.totalorder %s744, 1
                %s749 = sphi %s727, %s727
                %s750 = sphi %s734, %s734
              $region59: #{up_conv_forward.1} parent=55 // loop_header_branch
                %747 = sbr.rel (%p745) target = $region63
              $region60: #{up_conv_forward.1} parent=55 // loop_body
                %v751 = vld [vmem:[%s749] sm:%s742]
                %752 = vst [vmem:[%s750] sm:%s742] %v751
                %v753 = vld [vmem:[%s749 + $0x4] sm:%s742]
                %754 = vst [vmem:[%s750 + $0x8] sm:%s742] %v753
                %v755 = vld [vmem:[%s749 + $0x8] sm:%s742]
                %756 = vst [vmem:[%s750 + $0x10] sm:%s742] %v755
                %v757 = vld [vmem:[%s749 + $0xc] sm:%s742]
                %758 = vst [vmem:[%s750 + $0x18] sm:%s742] %v757
              $region61: #{up_conv_forward.1} parent=55 // loop_footer
                %s748 = sadd.s32 1, %s744
              $region62: #{up_conv_forward.1} parent=55 // loop_footer_branch
                %743 = sbr.rel target = $region58
              $region63: #{up_conv_forward.1} parent=55 // loop_exit
                _
            $region56: #{up_conv_forward.1} parent=47 // pred_fallthru
              _
          $region48: #{up_conv_forward.1} parent=43 // pred_fallthru
            _
          %787 = vnop
        $region44: #{up_conv_forward.1} parent=39 // pred_fallthru
          _
      $region40: #{up_conv_forward.1} parent=5 // pred_fallthru
        _
      %p788 = scmp.le.s32.totalorder 2, %s11
      // Predicated region
      $region82: #{up_conv_forward.1} parent=5 // pred_check
        %p789 = pneg %p788
      $region83: #{up_conv_forward.1} parent=5 // pred_check_branch
        %791 = sbr.rel (%p789) target = $region85
      $region84: #{up_conv_forward.1} parent=5 // pred_region
        %s792 = ssub.s32 %s11, 2
        // Predicated region
        $region86: #{up_conv_forward.1} parent=84 // pred_check
          %p793 = pneg %p166
        $region87: #{up_conv_forward.1} parent=84 // pred_check_branch
          %795 = sbr.rel (%p793) target = $region89
        $region88: #{up_conv_forward.1} parent=84 // pred_region
          %s796 = sand.u32 %s151, 1
          %s797 = sand.u32 %s151, 1
          %s798 = smul.addr %s797, 16
          %s799 = scalar_lea.vmem [#allocation2], %s798
        $region89: #{up_conv_forward.1} parent=84 // pred_fallthru
          _
      $region85: #{up_conv_forward.1} parent=5 // pred_fallthru
        _
    $region6: #{up_conv_forward.1} parent=1 // loop_footer
      %s15 = sadd.s32 1, %s11
    $region7: #{up_conv_forward.1} parent=1 // loop_footer_branch
      %10 = sbr.rel target = $region3
    $region8: #{up_conv_forward.1} parent=1 // loop_exit
      _

</llo_original>
